<compile_context>
chip_gen: v7x
topology: tpu7x:2x2x1
jax: 0.10.0
libtpu: 0.0.40
codegen_flags: <defaults>
</compile_context>

<pallas_src>
import functools
import math

import numpy as np
import jax
import jax.numpy as jnp
from jax.experimental import pallas as pl
from jax.experimental.pallas import tpu as pltpu

# ----------------------------- module configuration -----------------------------
INPUT_STAB = 1      # input_stabilizer_size  (Z2 input)
OUTPUT_STAB = 4     # output_stabilizer_size (C4 group)
IN_CH = 4           # in_channels  (1 Lorentz time + 3 space channels)
OUT_CH = 8          # out_channels
KSIZE = 3           # kernel_size
STRIDE = 1
PAD = 1
DIL = 1
K_MANIFOLD = 1.0    # CustomLorentz curvature k (default 1.0)

LANE = 128          # TPU lane width
KLEN = KSIZE * KSIZE

B, H, W = 2, 16, 16  # small example input (channel-last)


# ----------------------------- group transformation indices -----------------------------
# TODO(synk): GrouPy's make_c4_z2_indices is not importable here; reimplemented locally with a
#             standard C4 rotation convention (may differ from GrouPy by rotation direction).
def make_c4_z2_indices(ksize):
    k = ksize
    inds = np.zeros((4, 1, k, k, 3), dtype=np.int32)
    for g in range(4):
        for u in range(k):
            for v in range(k):
                uu, vv = u, v
                for _ in range(g):
                    uu, vv = k - 1 - vv, uu
                inds[g, 0, u, v, 0] = 0
                inds[g, 0, u, v, 1] = uu
                inds[g, 0, u, v, 2] = vv
    return inds


# ----------------------------- Pallas kernel -----------------------------
def _glfc_group_kernel(p_ref, wbd_ref, sg_ref, aux_ref, o_ref, *, k_val):
    # p_ref:   (TM4, PACK*28)        PACK patches per row: [t_rescaled, 27 space taps] each
    # wbd_ref: (PACK*28, PACK*G*OCP) block-diagonal group-folded weight (time weight folded in)
    # sg_ref:  (PACK*G*OCP, PACK*G*OCP) add_time segment-sum over the space cols of each OC-block
    # aux_ref: (2, PACK*G*OCP)       rows: [bias, time-column mask]
    p = p_ref[...]                                                      # f32

    # LorentzFullyConnected linear: all PACK patches x all groups/out-channels in one GEMM.
    y = jnp.dot(p, wbd_ref[...], preferred_element_type=jnp.float32)    # (TM4, PACK*G*OCP)
    y = y + aux_ref[0:1, :]                                             # + bias

    # manifold.add_time: recompute the time lane of every (patch, group) OC-block on the MXU.
    ssum = jnp.dot(y * y, sg_ref[...], preferred_element_type=jnp.float32)
    t_out = jnp.sqrt(ssum + k_val)
    tmask = aux_ref[1:2, :]
    o_ref[...] = (y + tmask * (t_out - y)).astype(o_ref.dtype)


def _row_tile(n4):
    # Target >=8 grid steps (>=4 per TensorCore on a 2-core v7x) so each core keeps a multi-step,
    # double-buffered pipeline; cap raised to 1024 packed rows (~0.5 MiB f32 input tile,
    # double-buffered: far under the 32 MiB scoped VMEM on every generation).
    t = -(-n4 // 8)                    # cdiv(n4, 8): aim for 8 steps
    t = -(-t // 8) * 8                 # sublane multiple
    return max(8, min(1024, t))


def lorentz_group_lfc(p4, wbd, sg, aux, tm4, k_val):
    n4_pad, pck = p4.shape
    _, goc_pack = wbd.shape
    # Constant operands (wbd/sg/aux) have a fixed block index; double-buffering them only costs
    # ~250 KiB of VMEM, so the default pipeline mode is kept.
    return pl.pallas_call(
        functools.partial(_glfc_group_kernel, k_val=k_val),
        out_shape=jax.ShapeDtypeStruct((n4_pad, goc_pack), jnp.float32),
        grid_spec=pltpu.PrefetchScalarGridSpec(
            num_scalar_prefetch=0,
            grid=(n4_pad // tm4,),
            in_specs=[
                pl.BlockSpec((tm4, pck), lambda i: (i, 0)),
                pl.BlockSpec((pck, goc_pack), lambda i: (0, 0)),
                pl.BlockSpec((goc_pack, goc_pack), lambda i: (0, 0)),
                pl.BlockSpec((2, goc_pack), lambda i: (0, 0)),
            ],
            out_specs=pl.BlockSpec((tm4, goc_pack), lambda i: (i, 0)),
        ),
        compiler_params=pltpu.CompilerParams(
            dimension_semantics=("parallel",),
            vmem_limit_bytes=32 * 1024 * 1024,
        ),
    )(p4, wbd, sg, aux)


# ----------------------------- weight folding (group transform -> weight) -----------------------------
def build_group_weights(weight, bias_vec, inds):
    G = inds.shape[0]
    CS = IN_CH - 1                          # space channels
    PCOL = 1 + CS * KLEN                    # 28 columns per patch: [t_rescaled, space taps]

    # Pack PACK patches per kernel row so the output slab is a dense multiple of 128 lanes;
    # pad OUT_CH with dummy channels (dropped in the wrapper) whenever G*OUT_CH doesn't divide 128.
    oc_pad = OUT_CH
    if G * OUT_CH < LANE:
        while LANE % (G * oc_pad) != 0:
            oc_pad += 1
        pack = LANE // (G * oc_pad)
    else:
        pack = 1  # TODO(synk): for G*OUT_CH >= 128, also pad G*oc_pad up to a multiple of 128.
    GOCP = G * oc_pad

    # spatial tap permutation of group g:  perm[g, t] = source tap q = u_g(t)*kW + v_g(t)
    perm = np.zeros((G, KLEN), dtype=np.int64)
    for g in range(G):
        for u in range(KSIZE):
            for v in range(KSIZE):
                perm[g, u * KSIZE + v] = (int(inds[g, 0, u, v, 1]) * KSIZE
                                          + int(inds[g, 0, u, v, 2]))

    # Fold trans_filter_patches + extract_lorentz_patches' [c,k]->[k,c] reorder + the time weight
    # weight[:, 0] into a single per-group (PCOL, oc_pad) weight.
    wfold_cols = []
    for g in range(G):
        inv = np.empty(KLEN, dtype=np.int64)
        inv[perm[g]] = np.arange(KLEN)                          # inv[q] = t with perm[g, t] == q
        col_idx = np.zeros((CS * KLEN,), dtype=np.int64)
        for c in range(CS):
            for q in range(KLEN):
                col_idx[c * KLEN + q] = 1 + inv[q] * CS + c     # weight col for patch row (c, q)
        w_space = weight[:, col_idx].T                          # (CS*KLEN, OUT_CH)
        w_time = weight[:, 0][None, :]                          # (1, OUT_CH)  t_rescaled weight
        wg = jnp.concatenate([w_time, w_space], axis=0)         # (PCOL, OUT_CH)
        if oc_pad != OUT_CH:
            wg = jnp.pad(wg, ((0, 0), (0, oc_pad - OUT_CH)))
        wfold_cols.append(wg)
    wfold = jnp.concatenate(wfold_cols, axis=1).astype(jnp.float32)   # (PCOL, GOCP)

    # Block-diagonal over `pack` packed patches -> one (pack*PCOL, pack*GOCP) GEMM weight.
    # pack stays the minimum value that makes G*oc_pad*pack a multiple of 128 (larger pack would
    # only add wasted MXU pushes since useful fraction of the block-diagonal weight is 1/pack).
    zero_blk = jnp.zeros((PCOL, GOCP), jnp.float32)
    rows = []
    for s in range(pack):
        row = [zero_blk] * pack
        row[s] = wfold
        rows.append(jnp.concatenate(row, axis=1))
    wbd = jnp.concatenate(rows, axis=0)                         # (pack*PCOL, pack*GOCP)

    # add_time segment-sum: space columns of each (patch, group) OC-block -> every col of block
    sg_np = np.zeros((pack * GOCP, pack * GOCP), np.float32)
    for j in range(pack * GOCP):
        if j % oc_pad != 0:
            b0 = (j // oc_pad) * oc_pad
            sg_np[j, b0:b0 + oc_pad] = 1.0

    bias_pad = bias_vec
    if oc_pad != OUT_CH:
        bias_pad = jnp.concatenate([bias_vec, jnp.zeros((oc_pad - OUT_CH,), bias_vec.dtype)])
    bias_row = jnp.tile(bias_pad, G * pack)
    tmask_np = np.zeros((pack * GOCP,), np.float32)
    tmask_np[::oc_pad] = 1.0
    aux = jnp.stack([bias_row, jnp.asarray(tmask_np)], axis=0).astype(jnp.float32)

    return wbd, jnp.asarray(sg_np), aux, pack, oc_pad


# ----------------------------- patch extraction (layout glue, fused by XLA under jit) ----------
def _extract_taps(x, h_out, w_out):
    """KLEN shifted views of the module's channel-first reinterpretation of x (padded)."""
    bsz, h, w, _ = x.shape
    # exact reproduction of the module's .view(bsz, C', H, W)  (pure reshape, NOT a permute)
    x_cf = x.reshape(bsz, IN_CH * INPUT_STAB, h, w)
    xp = jnp.pad(x_cf, ((0, 0), (0, 0), (PAD, PAD), (PAD, PAD)))
    taps = []
    for u in range(KSIZE):
        for v in range(KSIZE):
            taps.append(xp[:, :,
                           u * DIL: u * DIL + (h_out - 1) * STRIDE + 1: STRIDE,
                           v * DIL: v * DIL + (w_out - 1) * STRIDE + 1: STRIDE])
    return jnp.stack(taps, axis=-1)                    # (B, C', h_out, w_out, KLEN)


def build_packed_patches(x, h_out, w_out, pack, k_val):
    bsz = x.shape[0]
    CS = IN_CH - 1
    pcol = 1 + CS * KLEN
    sqrt_k = math.sqrt(k_val)

    taps = _extract_taps(x, h_out, w_out)                              # (B, C', ho, wo, KLEN)

    # extract_lorentz_patches time part (group-invariant -> computed once per patch):
    # clamp the KLEN time taps, sum of squares, re-project.  Fuses with the unfold under jit.
    t_taps = jnp.maximum(taps[:, 0], sqrt_k)                           # (B, ho, wo, KLEN)
    t_resc = jnp.sqrt(jnp.sum(t_taps * t_taps, axis=-1, keepdims=True)
                      - (KLEN - 1) * k_val)                            # (B, ho, wo, 1)

    sp = jnp.transpose(taps[:, 1:], (0, 2, 3, 1, 4))                   # (B, ho, wo, CS, KLEN)
    sp = sp.reshape(bsz, h_out, w_out, CS * KLEN)
    p = jnp.concatenate([t_resc, sp], axis=-1)                         # (B, ho, wo, 28)
    p_flat = p.reshape(bsz * h_out * w_out, pcol)

    n = p_flat.shape[0]
    n4 = -(-n // pack)
    tm4 = _row_tile(n4)
    n4_pad = -(-n4 // tm4) * tm4
    pad_rows = n4_pad * pack - n
    if pad_rows:
        # ragged tail padded inside the fused patch construction (no separate HBM pass)
        p_flat = jnp.pad(p_flat, ((0, pad_rows), (0, 0)))
    p4 = p_flat.reshape(n4_pad, pack * pcol)                           # rows contiguous: free pack
    return p4, tm4, n


# ----------------------------- forward (glue + kernel) -----------------------------
@functools.partial(jax.jit, static_argnames=("pack", "oc_pad", "n_groups", "h_out", "w_out"))
def _forward_impl(x, wbd, sg, aux, *, pack, oc_pad, n_groups, h_out, w_out):
    bsz = x.shape[0]
    L = h_out * w_out
    p4, tm4, n = build_packed_patches(x, h_out, w_out, pack, K_MANIFOLD)
    out4 = lorentz_group_lfc(p4, wbd, sg, aux, tm4, K_MANIFOLD)        # (n4_pad, pack*G*oc_pad)
    out_flat = out4.reshape(-1, n_groups * oc_pad)[:n]                 # drop padding rows
    out = out_flat.reshape(bsz, L, n_groups, oc_pad)[..., :OUT_CH]     # drop dummy out-channels
    out = jnp.transpose(out, (0, 2, 1, 3))                             # torch.stack(..., dim=1)
    return out.reshape(bsz, n_groups, h_out, w_out, OUT_CH)


def group_lorentz_conv2d_forward(x, weight, bias_vec, inds):
    _, h, w, _ = x.shape
    h_out = (h + 2 * PAD - DIL * (KSIZE - 1) - 1) // STRIDE + 1
    w_out = (w + 2 * PAD - DIL * (KSIZE - 1) - 1) // STRIDE + 1
    wbd, sg, aux, pack, oc_pad = build_group_weights(weight, bias_vec, inds)
    return _forward_impl(x, wbd, sg, aux, pack=pack, oc_pad=oc_pad,
                         n_groups=inds.shape[0], h_out=h_out, w_out=w_out)


# ----------------------------- pure-JAX reference (explicit patch-transform path) ---------------
def reference_forward(x, weight, bias_vec, inds, k_val):
    bsz, h, w, _ = x.shape
    h_out = (h + 2 * PAD - DIL * (KSIZE - 1) - 1) // STRIDE + 1
    w_out = (w + 2 * PAD - DIL * (KSIZE - 1) - 1) // STRIDE + 1
    L = h_out * w_out
    G = inds.shape[0]

    taps = _extract_taps(x, h_out, w_out)                              # (B, C', ho, wo, KLEN)
    patches = jnp.transpose(taps, (0, 2, 3, 1, 4)).reshape(bsz, L, IN_CH * INPUT_STAB * KLEN)
    patches = patches.reshape(bsz, L, IN_CH, INPUT_STAB, KSIZE, KSIZE)
    patches = jnp.tile(patches, (1, 1, 1, OUTPUT_STAB, 1, 1))

    inds_r = inds.reshape(-1, inds.shape[-1]).astype(np.int64)
    pt = patches[:, :, :, inds_r[:, 0], inds_r[:, 1], inds_r[:, 2]]
    pt = pt.reshape(bsz, L, IN_CH * inds.shape[1], inds.shape[0], inds.shape[2] * inds.shape[3])
    pt = jnp.transpose(pt, (3, 0, 1, 2, 4)).reshape(G, bsz, L, IN_CH * KLEN)

    sqrt_k = math.sqrt(k_val)
    t = jnp.maximum(pt[..., :KLEN], sqrt_k)
    tr = jnp.sqrt(jnp.sum(t * t, -1, keepdims=True) - (KLEN - 1) * k_val)
    sp = pt[..., KLEN:]
    shp = sp.shape
    sp = sp.reshape(shp[:-1] + (IN_CH - 1, KLEN))
    sp = jnp.swapaxes(sp, -1, -2).reshape(shp)
    pre = jnp.concatenate([tr, sp], -1)
    y = pre @ weight.T + bias_vec
    ys = y[..., 1:]
    yt = jnp.sqrt(jnp.sum(ys * ys, -1, keepdims=True) + k_val)
    out = jnp.concatenate([yt, ys], -1)                                # (G, B, L, OC)
    out = jnp.transpose(out, (1, 0, 2, 3))
    return out.reshape(bsz, G, h_out, w_out, OUT_CH)


# ----------------------------- main -----------------------------
if __name__ == "__main__":
    key = jax.random.PRNGKey(0)
    k1, k2, k3 = jax.random.split(key, 3)

    lin_features = (IN_CH - 1) * KSIZE * KSIZE + 1
    stdv = math.sqrt(2.0 / ((IN_CH - 1) * KSIZE * KSIZE))
    weight = jax.random.uniform(k1, (OUT_CH, lin_features), jnp.float32, -stdv, stdv)
    bias_vec = jax.random.uniform(k2, (OUT_CH,), jnp.float32, -stdv, stdv)
    x = jax.random.normal(k3, (B, H, W, IN_CH * INPUT_STAB), jnp.float32)

    inds = make_c4_z2_indices(KSIZE)

    out = group_lorentz_conv2d_forward(x, weight, bias_vec, inds)
    out = jax.block_until_ready(out)

    h_out = (H + 2 * PAD - DIL * (KSIZE - 1) - 1) // STRIDE + 1
    w_out = (W + 2 * PAD - DIL * (KSIZE - 1) - 1) // STRIDE + 1
    assert out.shape == (B, OUTPUT_STAB, h_out, w_out, OUT_CH), out.shape

    ref = reference_forward(x, weight, bias_vec, inds, K_MANIFOLD)
    err = float(jnp.max(jnp.abs(out - ref)))
    if not np.isfinite(err) or err > 2e-4:
        raise AssertionError(f"Pallas kernel mismatch vs reference, max abs err={err}")

    print("KERNEL_OK")
</pallas_src>

<mosaic_0001>
module attributes {stable_mosaic.version = 11 : i64} {
  func.func @_glfc_group_kernel(%arg0: i32, %arg1: memref<16x112xf32, #tpu.memory_space<vmem>>, %arg2: memref<112x128xf32, #tpu.memory_space<vmem>>, %arg3: memref<128x128xf32, #tpu.memory_space<vmem>>, %arg4: memref<2x128xf32, #tpu.memory_space<vmem>>, %arg5: memref<16x128xf32, #tpu.memory_space<vmem>>) attributes {dimension_semantics = [#tpu.dimension_semantics<parallel>], iteration_bounds = array<i64: 8>, scalar_prefetch = 0 : i64, scratch_operands = 0 : i64, tpu.core_type = #tpu.core_type<tc>, window_params = [{transform_indices = @transform_0, window_bounds = array<i64: 16, 112>}, {pipeline_mode = #tpu.pipeline_mode<synchronous>, transform_indices = @transform_1, window_bounds = array<i64: 112, 128>}, {pipeline_mode = #tpu.pipeline_mode<synchronous>, transform_indices = @transform_2, window_bounds = array<i64: 128, 128>}, {pipeline_mode = #tpu.pipeline_mode<synchronous>, transform_indices = @transform_3, window_bounds = array<i64: 2, 128>}, {transform_indices = @transform_4, window_bounds = array<i64: 16, 128>}]} {
    %c0 = arith.constant 0 : index
    %c0_0 = arith.constant 0 : index
    %0 = vector.load %arg1[%c0, %c0_0] : memref<16x112xf32, #tpu.memory_space<vmem>>, vector<16x112xf32>
    %c0_1 = arith.constant 0 : index
    %c0_2 = arith.constant 0 : index
    %1 = vector.load %arg2[%c0_1, %c0_2] : memref<112x128xf32, #tpu.memory_space<vmem>>, vector<112x128xf32>
    %cst = arith.constant dense<0.000000e+00> : vector<16x128xf32>
    %2 = tpu.matmul %0, %1, %cst {dimension_numbers = #tpu.dot_dimension_numbers<[1], [0], [0], [1], [0, 0, 1, 1], [], []>} : vector<16x112xf32>, vector<112x128xf32>, vector<16x128xf32> -> vector<16x128xf32>
    %c0_3 = arith.constant 0 : index
    %c0_4 = arith.constant 0 : index
    %3 = vector.load %arg4[%c0_3, %c0_4] : memref<2x128xf32, #tpu.memory_space<vmem>>, vector<1x128xf32>
    %4 = vector.broadcast %3 : vector<1x128xf32> to vector<16x128xf32>
    %5 = arith.addf %2, %4 : vector<16x128xf32>
    %6 = arith.mulf %5, %5 : vector<16x128xf32>
    %c0_5 = arith.constant 0 : index
    %c0_6 = arith.constant 0 : index
    %7 = vector.load %arg3[%c0_5, %c0_6] : memref<128x128xf32, #tpu.memory_space<vmem>>, vector<128x128xf32>
    %cst_7 = arith.constant dense<0.000000e+00> : vector<16x128xf32>
    %8 = tpu.matmul %6, %7, %cst_7 {dimension_numbers = #tpu.dot_dimension_numbers<[1], [0], [0], [1], [0, 0, 1, 1], [], []>} : vector<16x128xf32>, vector<128x128xf32>, vector<16x128xf32> -> vector<16x128xf32>
    %cst_8 = arith.constant 1.000000e+00 : f32
    %9 = vector.broadcast %cst_8 : f32 to vector<16x128xf32>
    %10 = arith.addf %8, %9 : vector<16x128xf32>
    %11 = math.sqrt %10 : vector<16x128xf32>
    %c1 = arith.constant 1 : index
    %c0_9 = arith.constant 0 : index
    %12 = vector.load %arg4[%c1, %c0_9] : memref<2x128xf32, #tpu.memory_space<vmem>>, vector<1x128xf32>
    %13 = arith.subf %11, %5 : vector<16x128xf32>
    %14 = vector.broadcast %12 : vector<1x128xf32> to vector<16x128xf32>
    %15 = arith.mulf %14, %13 : vector<16x128xf32>
    %16 = arith.addf %5, %15 : vector<16x128xf32>
    %c0_10 = arith.constant 0 : index
    %c0_11 = arith.constant 0 : index
    %17 = vector.load %arg5[%c0_10, %c0_11] : memref<16x128xf32, #tpu.memory_space<vmem>>, vector<16x128xf32>
    tpu.vector_store %arg5[%c0_10, %c0_11], %16 {strides = array<i32>} : memref<16x128xf32, #tpu.memory_space<vmem>>, vector<16x128xf32>,
    return
  }
  func.func @transform_0(%arg0: i32) -> (i32, i32) {
    %c0_i32 = arith.constant 0 : i32
    %c0_i32_0 = arith.constant 0 : i32
    return %arg0, %c0_i32 : i32, i32
  }
  func.func @transform_1(%arg0: i32) -> (i32, i32) {
    %c0_i32 = arith.constant 0 : i32
    %c0_i32_0 = arith.constant 0 : i32
    %c0_i32_1 = arith.constant 0 : i32
    return %c0_i32, %c0_i32_0 : i32, i32
  }
  func.func @transform_2(%arg0: i32) -> (i32, i32) {
    %c0_i32 = arith.constant 0 : i32
    %c0_i32_0 = arith.constant 0 : i32
    %c0_i32_1 = arith.constant 0 : i32
    return %c0_i32, %c0_i32_0 : i32, i32
  }
  func.func @transform_3(%arg0: i32) -> (i32, i32) {
    %c0_i32 = arith.constant 0 : i32
    %c0_i32_0 = arith.constant 0 : i32
    %c0_i32_1 = arith.constant 0 : i32
    return %c0_i32, %c0_i32_0 : i32, i32
  }
  func.func @transform_4(%arg0: i32) -> (i32, i32) {
    %c0_i32 = arith.constant 0 : i32
    %c0_i32_0 = arith.constant 0 : i32
    return %arg0, %c0_i32 : i32, i32
  }
}

</mosaic_0001>

<llo_original>
// kernel: _forward_impl.1
$region0: #{_forward_impl.1}
  #allocation0 [shape = 'u32[]', space=smem, size = 0x4, offset = 0x4, fixed_abs, tag = 'smem constant byte address 0x4 - core index']
  #allocation1 [shape = 'u32[144,128]{1,0:T(1,128)}', space=vmem, size = 0x12000, scoped, tag = 'internal scratch']
  %s0 = inlined_call_operand.vmem [shape: f32[128,112], index: 0, kind: input, shape index: {}]
  %s1 = inlined_call_operand.vmem [shape: f32[112,128], index: 1, kind: input, shape index: {}]
  %s2 = inlined_call_operand.vmem [shape: f32[128,128], index: 2, kind: input, shape index: {}]
  %s3 = inlined_call_operand.vmem [shape: f32[2,128], index: 3, kind: input, shape index: {}]
  %s4 = inlined_call_operand.vmem [shape: f32[128,128], index: 4, kind: output, shape index: {}]
  %s5 = sld [smem:[#allocation0]]
  $region49: #{_forward_impl.1} parent=0
    _
  %s7 = ssub.s32 1, %s5
  %s8 = scalar_select 0, %s7, %s5
  loop: start=0, step=1, limit=10
  $region2: #{_forward_impl.1} parent=0 // loop_pre_header
    _
  $region3: #{_forward_impl.1} parent=0 // loop_header
    %s10 = sphi 0, %s14
    %p11 = scmp.ge.s32.totalorder %s10, 10
    %s20 = sphi 0, %s22
    %s23 = sphi 0, %s20
    %s24 = sphi 0, %s23
    %s40 = sphi 0, %s24
    %s44 = sphi 0, %s44
    %s46 = sphi 0, %s44
    %s47 = sphi 0, %s46
    %s61 = sphi 0, %s47
    %s65 = sphi 0, %s65
    %s67 = sphi 0, %s65
    %s68 = sphi 0, %s67
    %s82 = sphi 0, %s68
    %s86 = sphi 0, %s86
    %s88 = sphi 0, %s86
    %s89 = sphi 0, %s88
    %s103 = sphi 0, %s89
    %s109 = sphi 0, %s111
    %s112 = sphi 0, %s109
    %s113 = sphi 0, %s112
    %s129 = sphi 0, %s113
  $region4: #{_forward_impl.1} parent=0 // loop_header_branch
    %13 = sbr.rel (%p11) target = $region8
  $region5: #{_forward_impl.1} parent=0 // loop_body
    %s15 = ssub.s32 %s10, 1
    %s16 = ssub.s32 %s10, 2
    %s17 = sadd.s32 %s10, 1
    %s18 = ssub.s32 %s10, %s17
    %p19 = scmp.eq.s32.totalorder %s18, 0
    %s21 = sadd.s32 %s20, 1
    %s22 = scalar_select %p19, %s20, %s21
    %p25 = pneg %p19
    %p26 = scmp.eq.s32.totalorder %s10, 7
    %p27 = por %p25, %p26
    %p28 = scmp.ne.s32.totalorder %s20, %s23
    %p29 = scmp.eq.s32.totalorder %s10, 0
    %p30 = por %p28, %p29
    %p31 = scmp.ne.s32.totalorder %s20, %s23
    %p32 = scmp.eq.s32.totalorder %s15, 7
    %p33 = por %p31, %p32
    %p34 = scmp.ne.s32.totalorder %s23, %s24
    %p35 = scmp.eq.s32.totalorder %s15, 0
    %p36 = por %p34, %p35
    %p37 = scmp.ne.s32.totalorder %s23, %s24
    %p38 = scmp.eq.s32.totalorder %s16, 7
    %p39 = por %p37, %p38
    %p41 = scmp.ne.s32.totalorder %s24, %s40
    %p42 = scmp.eq.s32.totalorder %s16, 0
    %p43 = por %p41, %p42
    %s45 = sadd.s32 %s44, 1
    %p48 = scmp.eq.s32.totalorder %s10, 7
    %p49 = scmp.ne.s32.totalorder %s44, %s46
    %p50 = scmp.eq.s32.totalorder %s10, 0
    %p51 = por %p49, %p50
    %p52 = scmp.ne.s32.totalorder %s44, %s46
    %p53 = scmp.eq.s32.totalorder %s15, 7
    %p54 = por %p52, %p53
    %p55 = scmp.ne.s32.totalorder %s46, %s47
    %p56 = scmp.eq.s32.totalorder %s15, 0
    %p57 = por %p55, %p56
    %p58 = scmp.ne.s32.totalorder %s46, %s47
    %p59 = scmp.eq.s32.totalorder %s16, 7
    %p60 = por %p58, %p59
    %p62 = scmp.ne.s32.totalorder %s47, %s61
    %p63 = scmp.eq.s32.totalorder %s16, 0
    %p64 = por %p62, %p63
    %s66 = sadd.s32 %s65, 1
    %p69 = scmp.eq.s32.totalorder %s10, 7
    %p70 = scmp.ne.s32.totalorder %s65, %s67
    %p71 = scmp.eq.s32.totalorder %s10, 0
    %p72 = por %p70, %p71
    %p73 = scmp.ne.s32.totalorder %s65, %s67
    %p74 = scmp.eq.s32.totalorder %s15, 7
    %p75 = por %p73, %p74
    %p76 = scmp.ne.s32.totalorder %s67, %s68
    %p77 = scmp.eq.s32.totalorder %s15, 0
    %p78 = por %p76, %p77
    %p79 = scmp.ne.s32.totalorder %s67, %s68
    %p80 = scmp.eq.s32.totalorder %s16, 7
    %p81 = por %p79, %p80
    %p83 = scmp.ne.s32.totalorder %s68, %s82
    %p84 = scmp.eq.s32.totalorder %s16, 0
    %p85 = por %p83, %p84
    %s87 = sadd.s32 %s86, 1
    %p90 = scmp.eq.s32.totalorder %s10, 7
    %p91 = scmp.ne.s32.totalorder %s86, %s88
    %p92 = scmp.eq.s32.totalorder %s10, 0
    %p93 = por %p91, %p92
    %p94 = scmp.ne.s32.totalorder %s86, %s88
    %p95 = scmp.eq.s32.totalorder %s15, 7
    %p96 = por %p94, %p95
    %p97 = scmp.ne.s32.totalorder %s88, %s89
    %p98 = scmp.eq.s32.totalorder %s15, 0
    %p99 = por %p97, %p98
    %p100 = scmp.ne.s32.totalorder %s88, %s89
    %p101 = scmp.eq.s32.totalorder %s16, 7
    %p102 = por %p100, %p101
    %p104 = scmp.ne.s32.totalorder %s89, %s103
    %p105 = scmp.eq.s32.totalorder %s16, 0
    %p106 = por %p104, %p105
    %s107 = ssub.s32 %s10, %s17
    %p108 = scmp.eq.s32.totalorder %s107, 0
    %s110 = sadd.s32 %s109, 1
    %s111 = scalar_select %p108, %s109, %s110
    %p114 = pneg %p108
    %p115 = scmp.eq.s32.totalorder %s10, 7
    %p116 = por %p114, %p115
    %p117 = scmp.ne.s32.totalorder %s109, %s112
    %p118 = scmp.eq.s32.totalorder %s10, 0
    %p119 = por %p117, %p118
    %p120 = scmp.ne.s32.totalorder %s109, %s112
    %p121 = scmp.eq.s32.totalorder %s15, 7
    %p122 = por %p120, %p121
    %p123 = scmp.ne.s32.totalorder %s112, %s113
    %p124 = scmp.eq.s32.totalorder %s15, 0
    %p125 = por %p123, %p124
    %p126 = scmp.ne.s32.totalorder %s112, %s113
    %p127 = scmp.eq.s32.totalorder %s16, 7
    %p128 = por %p126, %p127
    %p130 = scmp.ne.s32.totalorder %s113, %s129
    %p131 = scmp.eq.s32.totalorder %s16, 0
    %p132 = por %p130, %p131
    %p133 = scmp.le.s32.totalorder 1, %s10
    %p134 = scmp.lt.s32.totalorder %s10, 9
    %p135 = pnand %p133, %p134
    %p136 = pneg %p135
    // Predicated region
    $region9: #{_forward_impl.1} parent=5 // pred_check
      _
    $region10: #{_forward_impl.1} parent=5 // pred_check_branch
      %138 = sbr.rel (%p135) target = $region12
    $region11: #{_forward_impl.1} parent=5 // pred_region
      %s139 = ssub.s32 %s10, 1
      // Predicated region
      $region13: #{_forward_impl.1} parent=11 // pred_check
        %p140 = pneg %p57
      $region14: #{_forward_impl.1} parent=11 // pred_check_branch
        %142 = sbr.rel (%p140) target = $region16
      $region15: #{_forward_impl.1} parent=11 // pred_region
        _
      $region16: #{_forward_impl.1} parent=11 // pred_fallthru
        _
      // Predicated region
      $region17: #{_forward_impl.1} parent=11 // pred_check
        %p143 = pneg %p78
      $region18: #{_forward_impl.1} parent=11 // pred_check_branch
        %145 = sbr.rel (%p143) target = $region20
      $region19: #{_forward_impl.1} parent=11 // pred_region
        _
      $region20: #{_forward_impl.1} parent=11 // pred_fallthru
        _
      // Predicated region
      $region21: #{_forward_impl.1} parent=11 // pred_check
        %p146 = pneg %p99
      $region22: #{_forward_impl.1} parent=11 // pred_check_branch
        %148 = sbr.rel (%p146) target = $region24
      $region23: #{_forward_impl.1} parent=11 // pred_region
        _
      $region24: #{_forward_impl.1} parent=11 // pred_fallthru
        _
    $region12: #{_forward_impl.1} parent=5 // pred_fallthru
      _
    %p149 = scmp.lt.s32.totalorder %s10, 8
    // Predicated region
    $region25: #{_forward_impl.1} parent=5 // pred_check
      %p150 = pneg %p149
    $region26: #{_forward_impl.1} parent=5 // pred_check_branch
      %152 = sbr.rel (%p150) target = $region28
    $region27: #{_forward_impl.1} parent=5 // pred_region
      // Predicated region
      $region29: #{_forward_impl.1} parent=27 // pred_check
        %p153 = pneg %p30
      $region30: #{_forward_impl.1} parent=27 // pred_check_branch
        %155 = sbr.rel (%p153) target = $region32
      $region31: #{_forward_impl.1} parent=27 // pred_region
        %s156 = smul.u32 2, %s10
        %p157 = scmp.lt.s32.totalorder %s156, 15
        %s158 = scalar_select %p157, %s156, 15
        %s159 = smul.addr %s158, 8
        %s160 = scalar_lea.vmem %s0, %s159
        %s161 = smul.u32 2, %s10
      $region32: #{_forward_impl.1} parent=27 // pred_fallthru
        _
    $region28: #{_forward_impl.1} parent=5 // pred_fallthru
      _
    %p162 = scmp.le.s32.totalorder 1, %s10
    %p163 = scmp.lt.s32.totalorder %s10, 9
    %p164 = pnand %p162, %p163
    %p165 = pneg %p164
    // Predicated region
    $region33: #{_forward_impl.1} parent=5 // pred_check
      _
    $region34: #{_forward_impl.1} parent=5 // pred_check_branch
      %167 = sbr.rel (%p164) target = $region36
    $region35: #{_forward_impl.1} parent=5 // pred_region
      %s168 = ssub.s32 %s10, 1
      %s169 = smul.u32 2, %s15
      %p170 = scmp.lt.s32.totalorder %s169, 15
      %s171 = scalar_select %p170, %s169, 15
      %s172 = smul.addr %s171, 8
      %s173 = scalar_lea.vmem %s0, %s172
      %p174 = pneg %p36
      %p175 = pneg %p33
      %p176 = pneg %p57
      %p177 = pneg %p54
      %p178 = pneg %p78
      %p179 = pneg %p75
      %p180 = pneg %p99
      %p181 = pneg %p96
      %p182 = pneg %p125
      %p183 = pneg %p122
      %s184 = smul.u32 2, %s15
      %p185 = scmp.lt.s32.totalorder %s184, 15
      %s186 = scalar_select %p185, %s184, 15
      %s187 = smul.addr %s186, 8
      %s188 = scalar_lea.vmem %s4, %s187
      %s189 = smul.u32 2, %s15
      %p190 = scmp.lt.s32.totalorder %s189, 15
      %s191 = scalar_select %p190, %s189, 15
      %s192 = smul.addr %s191, 8
      %s193 = scalar_lea.vmem %s0, %s192
      %s194 = smul.u32 2, %s15
      %s195 = smul.u32 2, %s15
      %p196 = scmp.lt.s32.totalorder %s195, 15
      %s197 = scalar_select %p196, %s195, 15
      %s198 = smul.addr %s197, 8
      %s199 = scalar_lea.vmem %s4, %s198
      %s200 = smul.u32 2, %s15
      %v201 = vld [vmem:[%s193] sm:$0xff]
      %v202 = vld [vmem:[%s193 + $0x8] sm:$0xff]
      %v203 = vld [vmem:[%s1] sm:$0xff]
      %v204 = vld [vmem:[%s1 + $0x8] sm:$0xff]
      %v205 = vld [vmem:[%s1 + $0x10] sm:$0xff]
      %v206 = vld [vmem:[%s1 + $0x18] sm:$0xff]
      %v207 = vld [vmem:[%s1 + $0x20] sm:$0xff]
      %v208 = vld [vmem:[%s1 + $0x28] sm:$0xff]
      %v209 = vld [vmem:[%s1 + $0x30] sm:$0xff]
      %v210 = vld [vmem:[%s1 + $0x38] sm:$0xff]
      %v211 = vld [vmem:[%s1 + $0x40] sm:$0xff]
      %v212 = vld [vmem:[%s1 + $0x48] sm:$0xff]
      %v213 = vld [vmem:[%s1 + $0x50] sm:$0xff]
      %v214 = vld [vmem:[%s1 + $0x58] sm:$0xff]
      %v215 = vld [vmem:[%s1 + $0x60] sm:$0xff]
      %v216 = vld [vmem:[%s1 + $0x68] sm:$0xff]
      %v217 = vld [vmem:[%s3] sm:$0x1]
      %v218 = vlaneseq
      %v219 = vshrl.u32 %v218, 7
      %v220 = vsub.s32 0, %v219
      %v221 = vrot.slane %v217, %v220
      %vm222 = vcmask 916480
      %v224 = vsel %vm222, %v201, 0
      %v227 = vsel %vm222, %v202, 0
      %229 = vmatprep.subr.mxu0 0.0
      %230 = vmatpush1.msra.mxu0 %v203
      %231 = vmatprep.subr.mxu0 0.0
      %232 = vmatpush1.msra.mxu0 %v204
      %233 = vmatprep.subr.mxu0 0.0
      %234 = vmatpush1.msra.mxu0 %v205
      %235 = vmatprep.subr.mxu0 0.0
      %236 = vmatpush1.msra.mxu0 %v206
      %237 = vmatprep.subr.mxu0 0.0
      %238 = vmatpush1.msra.mxu0 %v207
      %239 = vmatprep.subr.mxu0 0.0
      %240 = vmatpush1.msra.mxu0 %v208
      %241 = vmatprep.subr.mxu0 0.0
      %242 = vmatpush1.msra.mxu0 %v209
      %243 = vmatprep.subr.mxu0 0.0
      %244 = vmatpush1.msra.mxu0 %v210
      %245 = vmatprep.subr.mxu0 0.0
      %246 = vmatpush1.msra.mxu0 %v211
      %247 = vmatprep.subr.mxu0 0.0
      %248 = vmatpush1.msra.mxu0 %v212
      %249 = vmatprep.subr.mxu0 0.0
      %250 = vmatpush1.msra.mxu0 %v213
      %251 = vmatprep.subr.mxu0 0.0
      %252 = vmatpush1.msra.mxu0 %v214
      %253 = vmatprep.subr.mxu0 0.0
      %254 = vmatpush1.msra.mxu0 %v215
      %255 = vmatprep.subr.mxu0 0.0
      %256 = vmatpush1.msra.mxu0 %v216
      %257 = vmatprep.subr.mxu0 0.0
      %258 = vmatpush1.msra.mxu0 0.0
      %259 = vmatprep.subr.mxu0 0.0
      %260 = vmatpush1.msra.mxu0 0.0
      %261 = vmatprep.subr.mxu0 0.0
      %262 = vmatpush1.msra.mxu0 0.0
      %263 = vmatprep.subr.mxu0 0.0
      %264 = vmatpush1.msra.mxu0 0.0
      %265 = vmatprep.subr.mxu0 0.0
      %266 = vmatpush1.msra.mxu0 0.0
      %267 = vmatprep.subr.mxu0 0.0
      %268 = vmatpush1.msra.mxu0 0.0
      %269 = vmatprep.subr.mxu0 0.0
      %270 = vmatpush1.msra.mxu0 0.0
      %271 = vmatprep.subr.mxu0 0.0
      %272 = vmatpush1.msra.mxu0 0.0
      %273 = vmatprep.subr.mxu0 0.0
      %274 = vmatpush1.msra.mxu0 0.0
      %275 = vmatprep.subr.mxu0 0.0
      %276 = vmatpush1.msra.mxu0 0.0
      %277 = vmatprep.subr.mxu0 0.0
      %278 = vmatpush1.msra.mxu0 0.0
      %279 = vmatprep.subr.mxu0 0.0
      %280 = vmatpush1.msra.mxu0 0.0
      %281 = vmatprep.subr.mxu0 0.0
      %282 = vmatpush1.msra.mxu0 0.0
      %283 = vmatprep.subr.mxu0 0.0
      %284 = vmatpush1.msra.mxu0 0.0
      %285 = vmatprep.subr.mxu0 0.0
      %286 = vmatpush1.msra.mxu0 0.0
      %287 = vmatprep.subr.mxu0 0.0
      %288 = vmatpush1.msra.mxu0 0.0
      %289 = vmatprep.subr.mxu0 0.0
      %290 = vmatpush1.msra.mxu0 0.0
      %291 = vmatprep.subr.mxu0 0.0
      %292 = vmatpush1.msra.mxu0 0.0
      %293 = vmatprep.mubr.f32.mxu0 0.0
      %294 = vmatmul.mubr.f32.gmra.mrb[0].mxu0 %v224
      %v295 = vpop.f32.mrb[0].mxu0
      %v296 = vadd.f32 %v221, %v295
      %v297 = vpop.f32.mrb[0].mxu0
      %298 = vmatprep.mubr.f32.mxu0 0.0
      %299 = vmatmul.mubr.f32.gmra.mrb[0].mxu0 %v227
      %v300 = vpop.f32.mrb[0].mxu0
      %v301 = vadd.f32 %v221, %v300
      %v302 = vpop.f32.mrb[0].mxu0
      %303 = vdwg.mxu0
      %v304 = vmul.f32 %v296, %v296
      %v305 = vmul.f32 %v301, %v301
      %v306 = vld [vmem:[%s2] sm:$0xff]
      %v307 = vld [vmem:[%s2 + $0x8] sm:$0xff]
      %v308 = vld [vmem:[%s2 + $0x10] sm:$0xff]
      %v309 = vld [vmem:[%s2 + $0x18] sm:$0xff]
      %v310 = vld [vmem:[%s2 + $0x20] sm:$0xff]
      %v311 = vld [vmem:[%s2 + $0x28] sm:$0xff]
      %v312 = vld [vmem:[%s2 + $0x30] sm:$0xff]
      %v313 = vld [vmem:[%s2 + $0x38] sm:$0xff]
      %v314 = vld [vmem:[%s2 + $0x40] sm:$0xff]
      %v315 = vld [vmem:[%s2 + $0x48] sm:$0xff]
      %v316 = vld [vmem:[%s2 + $0x50] sm:$0xff]
      %v317 = vld [vmem:[%s2 + $0x58] sm:$0xff]
      %v318 = vld [vmem:[%s2 + $0x60] sm:$0xff]
      %v319 = vld [vmem:[%s2 + $0x68] sm:$0xff]
      %v320 = vld [vmem:[%s2 + $0x70] sm:$0xff]
      %v321 = vld [vmem:[%s2 + $0x78] sm:$0xff]
      %322 = vmatprep.subr.mxu0 0.0
      %323 = vmatpush1.msra.mxu0 %v306
      %324 = vmatprep.subr.mxu0 0.0
      %325 = vmatpush1.msra.mxu0 %v307
      %326 = vmatprep.subr.mxu0 0.0
      %327 = vmatpush1.msra.mxu0 %v308
      %328 = vmatprep.subr.mxu0 0.0
      %329 = vmatpush1.msra.mxu0 %v309
      %330 = vmatprep.subr.mxu0 0.0
      %331 = vmatpush1.msra.mxu0 %v310
      %332 = vmatprep.subr.mxu0 0.0
      %333 = vmatpush1.msra.mxu0 %v311
      %334 = vmatprep.subr.mxu0 0.0
      %335 = vmatpush1.msra.mxu0 %v312
      %336 = vmatprep.subr.mxu0 0.0
      %337 = vmatpush1.msra.mxu0 %v313
      %338 = vmatprep.subr.mxu0 0.0
      %339 = vmatpush1.msra.mxu0 %v314
      %340 = vmatprep.subr.mxu0 0.0
      %341 = vmatpush1.msra.mxu0 %v315
      %342 = vmatprep.subr.mxu0 0.0
      %343 = vmatpush1.msra.mxu0 %v316
      %344 = vmatprep.subr.mxu0 0.0
      %345 = vmatpush1.msra.mxu0 %v317
      %346 = vmatprep.subr.mxu0 0.0
      %347 = vmatpush1.msra.mxu0 %v318
      %348 = vmatprep.subr.mxu0 0.0
      %349 = vmatpush1.msra.mxu0 %v319
      %350 = vmatprep.subr.mxu0 0.0
      %351 = vmatpush1.msra.mxu0 %v320
      %352 = vmatprep.subr.mxu0 0.0
      %353 = vmatpush1.msra.mxu0 %v321
      %354 = vmatprep.subr.mxu0 0.0
      %355 = vmatpush1.msra.mxu0 0.0
      %356 = vmatprep.subr.mxu0 0.0
      %357 = vmatpush1.msra.mxu0 0.0
      %358 = vmatprep.subr.mxu0 0.0
      %359 = vmatpush1.msra.mxu0 0.0
      %360 = vmatprep.subr.mxu0 0.0
      %361 = vmatpush1.msra.mxu0 0.0
      %362 = vmatprep.subr.mxu0 0.0
      %363 = vmatpush1.msra.mxu0 0.0
      %364 = vmatprep.subr.mxu0 0.0
      %365 = vmatpush1.msra.mxu0 0.0
      %366 = vmatprep.subr.mxu0 0.0
      %367 = vmatpush1.msra.mxu0 0.0
      %368 = vmatprep.subr.mxu0 0.0
      %369 = vmatpush1.msra.mxu0 0.0
      %370 = vmatprep.subr.mxu0 0.0
      %371 = vmatpush1.msra.mxu0 0.0
      %372 = vmatprep.subr.mxu0 0.0
      %373 = vmatpush1.msra.mxu0 0.0
      %374 = vmatprep.subr.mxu0 0.0
      %375 = vmatpush1.msra.mxu0 0.0
      %376 = vmatprep.subr.mxu0 0.0
      %377 = vmatpush1.msra.mxu0 0.0
      %378 = vmatprep.subr.mxu0 0.0
      %379 = vmatpush1.msra.mxu0 0.0
      %380 = vmatprep.subr.mxu0 0.0
      %381 = vmatpush1.msra.mxu0 0.0
      %382 = vmatprep.subr.mxu0 0.0
      %383 = vmatpush1.msra.mxu0 0.0
      %384 = vmatprep.subr.mxu0 0.0
      %385 = vmatpush1.msra.mxu0 0.0
      %386 = vmatprep.mubr.f32.mxu0 0.0
      %387 = vmatmul.mubr.f32.gmra.mrb[0].mxu0 %v304
      %v388 = vpop.f32.mrb[0].mxu0
      %v389 = vadd.f32 1.0, %v388
      %v390 = vpop.f32.mrb[0].mxu0
      %391 = vmatprep.mubr.f32.mxu0 0.0
      %392 = vmatmul.mubr.f32.gmra.mrb[0].mxu0 %v305
      %v393 = vpop.f32.mrb[0].mxu0
      %v394 = vadd.f32 1.0, %v393
      %v395 = vpop.f32.mrb[0].mxu0
      %396 = vdwg.mxu0
      %v397 = vrsqrt.pop %v389
      %v398 = vmul.f32 %v389, %v397
      %vm399 = vcmp.eq.f32.partialorder %v389, inf
      %v400 = vsel %vm399, %v389, %v398
      %vm401 = vcmp.eq.f32.partialorder %v389, 0.0
      %v402 = vand.u32 %v389, 2147483648
      %v403 = vsel %vm401, %v402, %v400
      %v404 = vrsqrt.pop %v394
      %v405 = vmul.f32 %v394, %v404
      %vm406 = vcmp.eq.f32.partialorder %v394, inf
      %v407 = vsel %vm406, %v394, %v405
      %vm408 = vcmp.eq.f32.partialorder %v394, 0.0
      %v409 = vand.u32 %v394, 2147483648
      %v410 = vsel %vm408, %v409, %v407
      %v411 = vld [vmem:[%s3 + $0x1] sm:$0x1]
      %v412 = vsub.f32 %v403, %v296
      %v413 = vsub.f32 %v410, %v301
      %v414 = vlaneseq
      %v415 = vshrl.u32 %v414, 7
      %v416 = vsub.s32 0, %v415
      %v417 = vrot.slane %v411, %v416
      %v418 = vmul.f32 %v417, %v412
      %v419 = vmul.f32 %v417, %v413
      %v420 = vadd.f32 %v296, %v418
      %v421 = vadd.f32 %v301, %v419
      %422 = vst [vmem:[%s199] sm:$0xff] %v420
      %423 = vst [vmem:[%s199 + $0x8] sm:$0xff] %v421
      %s424 = smul.u32 2, %s15
      %p425 = scmp.lt.s32.totalorder %s424, 15
      %s426 = scalar_select %p425, %s424, 15
      %s427 = smul.addr %s426, 8
      %s428 = scalar_lea.vmem %s4, %s427
      // Predicated region
      $region37: #{_forward_impl.1} parent=35 // pred_check
        %p429 = pneg %p122
      $region38: #{_forward_impl.1} parent=35 // pred_check_branch
        %431 = sbr.rel (%p429) target = $region40
      $region39: #{_forward_impl.1} parent=35 // pred_region
        %s432 = smul.u32 2, %s15
      $region40: #{_forward_impl.1} parent=35 // pred_fallthru
        _
    $region36: #{_forward_impl.1} parent=5 // pred_fallthru
      _
    %p433 = scmp.le.s32.totalorder 2, %s10
    // Predicated region
    $region41: #{_forward_impl.1} parent=5 // pred_check
      %p434 = pneg %p433
    $region42: #{_forward_impl.1} parent=5 // pred_check_branch
      %436 = sbr.rel (%p434) target = $region44
    $region43: #{_forward_impl.1} parent=5 // pred_region
      %s437 = ssub.s32 %s10, 2
      // Predicated region
      $region45: #{_forward_impl.1} parent=43 // pred_check
        %p438 = pneg %p128
      $region46: #{_forward_impl.1} parent=43 // pred_check_branch
        %440 = sbr.rel (%p438) target = $region48
      $region47: #{_forward_impl.1} parent=43 // pred_region
        %s441 = smul.u32 2, %s16
        %p442 = scmp.lt.s32.totalorder %s441, 15
        %s443 = scalar_select %p442, %s441, 15
        %s444 = smul.addr %s443, 8
        %s445 = scalar_lea.vmem %s4, %s444
      $region48: #{_forward_impl.1} parent=43 // pred_fallthru
        _
    $region44: #{_forward_impl.1} parent=5 // pred_fallthru
      _
  $region6: #{_forward_impl.1} parent=0 // loop_footer
    %s14 = sadd.s32 1, %s10
  $region7: #{_forward_impl.1} parent=0 // loop_footer_branch
    %9 = sbr.rel target = $region3
  $region8: #{_forward_impl.1} parent=0 // loop_exit
    _

</llo_original>
